<compile_context>
chip_gen: v5e
topology: v5e:2x2
jax: 0.10.0
libtpu: 0.0.40
codegen_flags: <defaults>
</compile_context>

<pallas_src>
import functools

import jax
import jax.numpy as jnp
from jax import lax
from jax.experimental import pallas as pl
from jax.experimental.pallas import tpu as pltpu

LANE = 128


def _round_up(v, m):
    return ((v + m - 1) // m) * m


# ----------------------------------------------------------------------------
# Fused kernel: f_theta MLP preamble + APPNP propagation hop loop.
# All operands arrive transposed (node axis N is the lane dim) and zero-padded.
#   xt : (in_pad, N)  f32        w1t: (h_pad, in_pad) f32   b1t: (h_pad, 1) f32
#   w2t: (f_pad, h_pad) f32      b2t: (f_pad, 1) f32
#   a  : (N, N) bf16, pre-scaled by (1 - alpha)
#   o  : (f_pad, N) f32
# ----------------------------------------------------------------------------
def _appnp_fused_kernel(xt_ref, w1t_ref, b1t_ref, w2t_ref, b2t_ref, a_ref, o_ref,
                        *, num_hops, alpha):
    # ---- f_theta MLP in transposed orientation (lane dim = nodes) ----
    ht = jnp.dot(w1t_ref[...], xt_ref[...],
                 preferred_element_type=jnp.float32)            # (h_pad, N)
    ht = jnp.maximum(ht + b1t_ref[...], 0.0)                    # ReLU, bias over sublanes
    z0t = jnp.dot(w2t_ref[...], ht,
                  preferred_element_type=jnp.float32) + b2t_ref[...]  # (f_pad, N)

    # ---- APPNP propagation: Z^T = (Z^T @ A') + alpha * Z0^T, A' = (1-a)*A ----
    alpha_z0t = jnp.float32(alpha) * z0t                        # hoisted out of loop

    def hop(_, zt):
        # A_hat symmetric => (A_hat @ Z)^T == Z^T @ A_hat. (1-alpha) folded into a_ref.
        azt = jnp.dot(zt.astype(jnp.bfloat16), a_ref[...],
                      preferred_element_type=jnp.float32)       # 16xNxN MXU, f32 acc
        return azt + alpha_z0t                                  # blend kept in f32

    zt = lax.fori_loop(0, num_hops, hop, z0t, unroll=True)
    o_ref[...] = zt                                             # single lane-dense store


# ----------------------------------------------------------------------------
# Wrapper: transpose + zero-pad operands, call the fused kernel, slice back.
# ----------------------------------------------------------------------------
def appnp_forward(a_hat, x, params, *, num_hops=10, alpha=0.1):
    n, in_size = x.shape
    hidden = params["w1"].shape[1]
    out_size = params["w2"].shape[1]

    in_pad = _round_up(max(in_size, LANE), LANE)     # contraction dims -> lane-dense
    h_pad = _round_up(max(hidden, LANE), LANE)
    f_pad = _round_up(out_size, 16)                  # feature dim: sublane minimum only

    # Zero-padded, transposed operands (padding with zeros does not change results).
    xt = jnp.pad(x, ((0, 0), (0, in_pad - in_size))).T                           # (in_pad, n)
    w1t = jnp.pad(params["w1"], ((0, in_pad - in_size), (0, h_pad - hidden))).T  # (h_pad, in_pad)
    b1t = jnp.pad(params["b1"], ((0, 0), (0, h_pad - hidden))).T                 # (h_pad, 1)
    w2t = jnp.pad(params["w2"], ((0, h_pad - hidden), (0, f_pad - out_size))).T  # (f_pad, h_pad)
    b2t = jnp.pad(params["b2"], ((0, 0), (0, f_pad - out_size))).T               # (f_pad, 1)

    # Fold (1 - alpha) into A (f32) then cast to bf16; kernel accumulates in f32.
    a_scaled = ((1.0 - alpha) * a_hat).astype(jnp.bfloat16)

    # Scoped VMEM: size to the actual footprint (a few MiB), never the full chip.
    footprint = (n * n * 2
                 + (in_pad * n + h_pad * in_pad + h_pad + f_pad * h_pad + f_pad) * 4
                 + (h_pad * n + 3 * f_pad * n) * 4)
    vmem_limit = int(min(max(2 * footprint, 4 << 20), 32 << 20))

    vmem = pl.BlockSpec(memory_space=pltpu.MemorySpace.VMEM)
    kernel = functools.partial(_appnp_fused_kernel, num_hops=num_hops, alpha=alpha)
    zt_pad = pl.pallas_call(
        kernel,
        out_shape=jax.ShapeDtypeStruct((f_pad, n), jnp.float32),
        in_specs=[vmem] * 6,
        out_specs=vmem,
        compiler_params=pltpu.CompilerParams(vmem_limit_bytes=vmem_limit),
    )(xt, w1t, b1t, w2t, b2t, a_scaled)
    return zt_pad[:out_size, :].T


# ----------------------------------------------------------------------------
# Synthetic setup helpers
# ----------------------------------------------------------------------------
def init_params(key, in_size, hidden_size, out_size):
    k1, k2, k3, k4 = jax.random.split(key, 4)
    w1 = jax.random.normal(k1, (in_size, hidden_size), jnp.float32) / jnp.sqrt(in_size)
    b1 = jax.random.normal(k2, (1, hidden_size), jnp.float32) * 0.01
    w2 = jax.random.normal(k3, (hidden_size, out_size), jnp.float32) / jnp.sqrt(hidden_size)
    b2 = jax.random.normal(k4, (1, out_size), jnp.float32) * 0.01
    return {"w1": w1, "b1": b1, "w2": w2, "b2": b2}


def make_a_hat(key, n):
    # Dense symmetric adjacency with self-loops, D^{-1/2} (A + I) D^{-1/2}.
    a = (jax.random.uniform(key, (n, n), jnp.float32) < 0.05).astype(jnp.float32)
    a = jnp.maximum(a, a.T)
    a = a + jnp.eye(n, dtype=jnp.float32)
    deg = a.sum(axis=1)
    d_inv_sqrt = 1.0 / jnp.sqrt(deg)
    return a * d_inv_sqrt[:, None] * d_inv_sqrt[None, :]


if __name__ == "__main__":
    N, IN_SIZE, HIDDEN, OUT_SIZE = 128, 32, 64, 16
    NUM_HOPS, ALPHA = 10, 0.1

    key = jax.random.PRNGKey(0)
    k_x, k_a, k_p = jax.random.split(key, 3)

    x = jax.random.normal(k_x, (N, IN_SIZE), jnp.float32)
    a_hat = make_a_hat(k_a, N)
    params = init_params(k_p, IN_SIZE, HIDDEN, OUT_SIZE)

    z = appnp_forward(a_hat, x, params, num_hops=NUM_HOPS, alpha=ALPHA)
    z = jax.block_until_ready(z)

    # Reference check in plain JAX (eval-mode dropout == identity), full f32.
    # Kernel uses bf16 for the A_hat @ Z matmul operands -> allow ~1e-2 tolerance.
    h_ref = jnp.maximum(x @ params["w1"] + params["b1"], 0.0)
    z0_ref = h_ref @ params["w2"] + params["b2"]
    z_ref = z0_ref
    for _ in range(NUM_HOPS):
        z_ref = (1.0 - ALPHA) * (a_hat @ z_ref) + ALPHA * z0_ref

    assert z.shape == (N, OUT_SIZE)
    assert jnp.allclose(z, z_ref, atol=3e-2, rtol=3e-2), float(
        jnp.max(jnp.abs(z - z_ref)))
    print("KERNEL_OK")
</pallas_src>

<mosaic_0001>
module attributes {stable_mosaic.version = 11 : i64} {
  func.func @_appnp_fused_kernel(%arg0: memref<128x128xf32, #tpu.memory_space<vmem>>, %arg1: memref<128x128xf32, #tpu.memory_space<vmem>>, %arg2: memref<128x1xf32, #tpu.memory_space<vmem>>, %arg3: memref<16x128xf32, #tpu.memory_space<vmem>>, %arg4: memref<16x1xf32, #tpu.memory_space<vmem>>, %arg5: memref<128x128xbf16, #tpu.memory_space<vmem>>, %arg6: memref<16x128xf32, #tpu.memory_space<vmem>>) attributes {dimension_semantics = [], scalar_prefetch = 0 : i64, scratch_operands = 0 : i64, tpu.core_type = #tpu.core_type<tc>} {
    %c0 = arith.constant 0 : index
    %c0_0 = arith.constant 0 : index
    %0 = vector.load %arg1[%c0, %c0_0] : memref<128x128xf32, #tpu.memory_space<vmem>>, vector<128x128xf32>
    %c0_1 = arith.constant 0 : index
    %c0_2 = arith.constant 0 : index
    %1 = vector.load %arg0[%c0_1, %c0_2] : memref<128x128xf32, #tpu.memory_space<vmem>>, vector<128x128xf32>
    %cst = arith.constant dense<0.000000e+00> : vector<128x128xf32>
    %2 = tpu.matmul %0, %1, %cst {dimension_numbers = #tpu.dot_dimension_numbers<[1], [0], [0], [1], [0, 0, 1, 1], [], []>} : vector<128x128xf32>, vector<128x128xf32>, vector<128x128xf32> -> vector<128x128xf32>
    %c0_3 = arith.constant 0 : index
    %c0_4 = arith.constant 0 : index
    %3 = vector.load %arg2[%c0_3, %c0_4] : memref<128x1xf32, #tpu.memory_space<vmem>>, vector<128x1xf32>
    %4 = vector.broadcast %3 : vector<128x1xf32> to vector<128x128xf32>
    %5 = arith.addf %2, %4 : vector<128x128xf32>
    %cst_5 = arith.constant 0.000000e+00 : f32
    %6 = vector.broadcast %cst_5 : f32 to vector<128x128xf32>
    %7 = arith.maximumf %5, %6 : vector<128x128xf32>
    %c0_6 = arith.constant 0 : index
    %c0_7 = arith.constant 0 : index
    %8 = vector.load %arg3[%c0_6, %c0_7] : memref<16x128xf32, #tpu.memory_space<vmem>>, vector<16x128xf32>
    %cst_8 = arith.constant dense<0.000000e+00> : vector<16x128xf32>
    %9 = tpu.matmul %8, %7, %cst_8 {dimension_numbers = #tpu.dot_dimension_numbers<[1], [0], [0], [1], [0, 0, 1, 1], [], []>} : vector<16x128xf32>, vector<128x128xf32>, vector<16x128xf32> -> vector<16x128xf32>
    %c0_9 = arith.constant 0 : index
    %c0_10 = arith.constant 0 : index
    %10 = vector.load %arg4[%c0_9, %c0_10] : memref<16x1xf32, #tpu.memory_space<vmem>>, vector<16x1xf32>
    %11 = vector.broadcast %10 : vector<16x1xf32> to vector<16x128xf32>
    %12 = arith.addf %9, %11 : vector<16x128xf32>
    %cst_11 = arith.constant 1.000000e-01 : f32
    %13 = vector.broadcast %cst_11 : f32 to vector<16x128xf32>
    %14 = arith.mulf %13, %12 : vector<16x128xf32>
    %c0_i32 = arith.constant 0 : i32
    %15 = arith.truncf %12 : vector<16x128xf32> to vector<16x128xbf16>
    %c0_12 = arith.constant 0 : index
    %c0_13 = arith.constant 0 : index
    %16 = vector.load %arg5[%c0_12, %c0_13] : memref<128x128xbf16, #tpu.memory_space<vmem>>, vector<128x128xbf16>
    %cst_14 = arith.constant dense<0.000000e+00> : vector<16x128xf32>
    %17 = tpu.matmul %15, %16, %cst_14 {dimension_numbers = #tpu.dot_dimension_numbers<[1], [0], [0], [1], [0, 0, 1, 1], [], []>} : vector<16x128xbf16>, vector<128x128xbf16>, vector<16x128xf32> -> vector<16x128xf32>
    %18 = arith.addf %17, %14 : vector<16x128xf32>
    %c1_i32 = arith.constant 1 : i32
    %19 = arith.truncf %18 : vector<16x128xf32> to vector<16x128xbf16>
    %c0_15 = arith.constant 0 : index
    %c0_16 = arith.constant 0 : index
    %20 = vector.load %arg5[%c0_15, %c0_16] : memref<128x128xbf16, #tpu.memory_space<vmem>>, vector<128x128xbf16>
    %cst_17 = arith.constant dense<0.000000e+00> : vector<16x128xf32>
    %21 = tpu.matmul %19, %20, %cst_17 {dimension_numbers = #tpu.dot_dimension_numbers<[1], [0], [0], [1], [0, 0, 1, 1], [], []>} : vector<16x128xbf16>, vector<128x128xbf16>, vector<16x128xf32> -> vector<16x128xf32>
    %22 = arith.addf %21, %14 : vector<16x128xf32>
    %c2_i32 = arith.constant 2 : i32
    %23 = arith.truncf %22 : vector<16x128xf32> to vector<16x128xbf16>
    %c0_18 = arith.constant 0 : index
    %c0_19 = arith.constant 0 : index
    %24 = vector.load %arg5[%c0_18, %c0_19] : memref<128x128xbf16, #tpu.memory_space<vmem>>, vector<128x128xbf16>
    %cst_20 = arith.constant dense<0.000000e+00> : vector<16x128xf32>
    %25 = tpu.matmul %23, %24, %cst_20 {dimension_numbers = #tpu.dot_dimension_numbers<[1], [0], [0], [1], [0, 0, 1, 1], [], []>} : vector<16x128xbf16>, vector<128x128xbf16>, vector<16x128xf32> -> vector<16x128xf32>
    %26 = arith.addf %25, %14 : vector<16x128xf32>
    %c3_i32 = arith.constant 3 : i32
    %27 = arith.truncf %26 : vector<16x128xf32> to vector<16x128xbf16>
    %c0_21 = arith.constant 0 : index
    %c0_22 = arith.constant 0 : index
    %28 = vector.load %arg5[%c0_21, %c0_22] : memref<128x128xbf16, #tpu.memory_space<vmem>>, vector<128x128xbf16>
    %cst_23 = arith.constant dense<0.000000e+00> : vector<16x128xf32>
    %29 = tpu.matmul %27, %28, %cst_23 {dimension_numbers = #tpu.dot_dimension_numbers<[1], [0], [0], [1], [0, 0, 1, 1], [], []>} : vector<16x128xbf16>, vector<128x128xbf16>, vector<16x128xf32> -> vector<16x128xf32>
    %30 = arith.addf %29, %14 : vector<16x128xf32>
    %c4_i32 = arith.constant 4 : i32
    %31 = arith.truncf %30 : vector<16x128xf32> to vector<16x128xbf16>
    %c0_24 = arith.constant 0 : index
    %c0_25 = arith.constant 0 : index
    %32 = vector.load %arg5[%c0_24, %c0_25] : memref<128x128xbf16, #tpu.memory_space<vmem>>, vector<128x128xbf16>
    %cst_26 = arith.constant dense<0.000000e+00> : vector<16x128xf32>
    %33 = tpu.matmul %31, %32, %cst_26 {dimension_numbers = #tpu.dot_dimension_numbers<[1], [0], [0], [1], [0, 0, 1, 1], [], []>} : vector<16x128xbf16>, vector<128x128xbf16>, vector<16x128xf32> -> vector<16x128xf32>
    %34 = arith.addf %33, %14 : vector<16x128xf32>
    %c5_i32 = arith.constant 5 : i32
    %35 = arith.truncf %34 : vector<16x128xf32> to vector<16x128xbf16>
    %c0_27 = arith.constant 0 : index
    %c0_28 = arith.constant 0 : index
    %36 = vector.load %arg5[%c0_27, %c0_28] : memref<128x128xbf16, #tpu.memory_space<vmem>>, vector<128x128xbf16>
    %cst_29 = arith.constant dense<0.000000e+00> : vector<16x128xf32>
    %37 = tpu.matmul %35, %36, %cst_29 {dimension_numbers = #tpu.dot_dimension_numbers<[1], [0], [0], [1], [0, 0, 1, 1], [], []>} : vector<16x128xbf16>, vector<128x128xbf16>, vector<16x128xf32> -> vector<16x128xf32>
    %38 = arith.addf %37, %14 : vector<16x128xf32>
    %c6_i32 = arith.constant 6 : i32
    %39 = arith.truncf %38 : vector<16x128xf32> to vector<16x128xbf16>
    %c0_30 = arith.constant 0 : index
    %c0_31 = arith.constant 0 : index
    %40 = vector.load %arg5[%c0_30, %c0_31] : memref<128x128xbf16, #tpu.memory_space<vmem>>, vector<128x128xbf16>
    %cst_32 = arith.constant dense<0.000000e+00> : vector<16x128xf32>
    %41 = tpu.matmul %39, %40, %cst_32 {dimension_numbers = #tpu.dot_dimension_numbers<[1], [0], [0], [1], [0, 0, 1, 1], [], []>} : vector<16x128xbf16>, vector<128x128xbf16>, vector<16x128xf32> -> vector<16x128xf32>
    %42 = arith.addf %41, %14 : vector<16x128xf32>
    %c7_i32 = arith.constant 7 : i32
    %43 = arith.truncf %42 : vector<16x128xf32> to vector<16x128xbf16>
    %c0_33 = arith.constant 0 : index
    %c0_34 = arith.constant 0 : index
    %44 = vector.load %arg5[%c0_33, %c0_34] : memref<128x128xbf16, #tpu.memory_space<vmem>>, vector<128x128xbf16>
    %cst_35 = arith.constant dense<0.000000e+00> : vector<16x128xf32>
    %45 = tpu.matmul %43, %44, %cst_35 {dimension_numbers = #tpu.dot_dimension_numbers<[1], [0], [0], [1], [0, 0, 1, 1], [], []>} : vector<16x128xbf16>, vector<128x128xbf16>, vector<16x128xf32> -> vector<16x128xf32>
    %46 = arith.addf %45, %14 : vector<16x128xf32>
    %c8_i32 = arith.constant 8 : i32
    %47 = arith.truncf %46 : vector<16x128xf32> to vector<16x128xbf16>
    %c0_36 = arith.constant 0 : index
    %c0_37 = arith.constant 0 : index
    %48 = vector.load %arg5[%c0_36, %c0_37] : memref<128x128xbf16, #tpu.memory_space<vmem>>, vector<128x128xbf16>
    %cst_38 = arith.constant dense<0.000000e+00> : vector<16x128xf32>
    %49 = tpu.matmul %47, %48, %cst_38 {dimension_numbers = #tpu.dot_dimension_numbers<[1], [0], [0], [1], [0, 0, 1, 1], [], []>} : vector<16x128xbf16>, vector<128x128xbf16>, vector<16x128xf32> -> vector<16x128xf32>
    %50 = arith.addf %49, %14 : vector<16x128xf32>
    %c9_i32 = arith.constant 9 : i32
    %51 = arith.truncf %50 : vector<16x128xf32> to vector<16x128xbf16>
    %c0_39 = arith.constant 0 : index
    %c0_40 = arith.constant 0 : index
    %52 = vector.load %arg5[%c0_39, %c0_40] : memref<128x128xbf16, #tpu.memory_space<vmem>>, vector<128x128xbf16>
    %cst_41 = arith.constant dense<0.000000e+00> : vector<16x128xf32>
    %53 = tpu.matmul %51, %52, %cst_41 {dimension_numbers = #tpu.dot_dimension_numbers<[1], [0], [0], [1], [0, 0, 1, 1], [], []>} : vector<16x128xbf16>, vector<128x128xbf16>, vector<16x128xf32> -> vector<16x128xf32>
    %54 = arith.addf %53, %14 : vector<16x128xf32>
    %c0_42 = arith.constant 0 : index
    %c0_43 = arith.constant 0 : index
    %55 = vector.load %arg6[%c0_42, %c0_43] : memref<16x128xf32, #tpu.memory_space<vmem>>, vector<16x128xf32>
    tpu.vector_store %arg6[%c0_42, %c0_43], %54 {strides = array<i32>} : memref<16x128xf32, #tpu.memory_space<vmem>>, vector<16x128xf32>,
    return
  }
}

</mosaic_0001>

<llo_original>
// kernel: tpu_custom_call.1
$region0: #{tpu_custom_call.1}
  #allocation0 [shape = 'u32[]', space=smem, size = 0x4, offset = 0x4, fixed_abs, tag = 'smem constant byte address 0x4 - core index']
  #allocation1 [shape = 'u32[72,128]{1,0:T(1,128)}', space=vmem, size = 0x9000, scoped, tag = 'internal scratch']
  %s0 = inlined_call_operand.vmem [shape: f32[128,128], index: 0, kind: input, shape index: {}]
  %s1 = inlined_call_operand.hbm [shape: f32[128,128], index: 1, kind: input, shape index: {}]
  %s2 = inlined_call_operand.vmem [shape: f32[128,1], index: 2, kind: input, shape index: {}]
  %s3 = inlined_call_operand.vmem [shape: f32[16,128], index: 3, kind: input, shape index: {}]
  %s4 = inlined_call_operand.vmem [shape: f32[16,1], index: 4, kind: input, shape index: {}]
  %s5 = inlined_call_operand.hbm [shape: bf16[128,128], index: 5, kind: input, shape index: {}]
  %s6 = inlined_call_operand.hbm [shape: f32[16,128], index: 6, kind: output, shape index: {}]
  %s7 = sld [smem:[#allocation0]]
  $region42: #{tpu_custom_call.1} parent=0
    _
  %s9 = ssub.s32 1, %s7
  %s10 = scalar_select 0, %s9, %s7
  $region1: #{tpu_custom_call.1} parent=0
    #allocation2 [shape = 'u8[65536]{0}', space=vmem, size = 0x10000, scoped, tag = 'input window, operand 1, single buffered']
    #allocation3 [shape = 's32[1]{0}', space=sflag, size = 0x4, scoped, tag = 'scoped memory for tpu_custom_call.1']
    #allocation4 [shape = 's32[1]{0}', space=sflag, size = 0x4, scoped, tag = 'scoped memory for tpu_custom_call.1']
    #allocation5 [shape = 'u8[32768]{0}', space=vmem, size = 0x8000, scoped, tag = 'input window, operand 5, single buffered']
    #allocation6 [shape = 's32[1]{0}', space=sflag, size = 0x4, scoped, tag = 'scoped memory for tpu_custom_call.1']
    #allocation7 [shape = 'u8[8192]{0}', space=vmem, size = 0x2000, scoped, tag = 'output window, operand 0, single buffered']
    %11 = vsyncpa [#allocation3], 0
    %12 = vsyncpa [#allocation6], 0
    %13 = vsyncpa [#allocation4], 0
    // Predicated region
    $region2: #{tpu_custom_call.1} parent=1 // pred_check
      _
    $region3: #{tpu_custom_call.1} parent=1 // pred_check_branch
      %15 = sbr.rel (0) target = $region5
    $region4: #{tpu_custom_call.1} parent=1 // pred_region
      _
    $region5: #{tpu_custom_call.1} parent=1 // pred_fallthru
      _
    // Predicated region
    $region6: #{tpu_custom_call.1} parent=1 // pred_check
      _
    $region7: #{tpu_custom_call.1} parent=1 // pred_check_branch
      %17 = sbr.rel (0) target = $region9
    $region8: #{tpu_custom_call.1} parent=1 // pred_region
      %19 = vsyncadd [#allocation3], 0
      %s20 = sshll.u32 %s1, 4
      %s21 = int_to_ptr.hbm [resolvable:$true] %s20
      %s22 = sshll.u32 [#allocation2], 4
      %s23 = int_to_ptr.vmem [resolvable:$true] %s22
      %28 = dma.hbm_to_vmem [thread:$0]  %s21, 2048, %s23, [#allocation3], 128, 128, 8
    $region9: #{tpu_custom_call.1} parent=1 // pred_fallthru
      _
    // Predicated region
    $region10: #{tpu_custom_call.1} parent=1 // pred_check
      _
    $region11: #{tpu_custom_call.1} parent=1 // pred_check_branch
      %30 = sbr.rel (0) target = $region13
    $region12: #{tpu_custom_call.1} parent=1 // pred_region
      _
    $region13: #{tpu_custom_call.1} parent=1 // pred_fallthru
      _
    // Predicated region
    $region14: #{tpu_custom_call.1} parent=1 // pred_check
      _
    $region15: #{tpu_custom_call.1} parent=1 // pred_check_branch
      %32 = sbr.rel (0) target = $region17
    $region16: #{tpu_custom_call.1} parent=1 // pred_region
      _
    $region17: #{tpu_custom_call.1} parent=1 // pred_fallthru
      _
    // Predicated region
    $region18: #{tpu_custom_call.1} parent=1 // pred_check
      _
    $region19: #{tpu_custom_call.1} parent=1 // pred_check_branch
      %34 = sbr.rel (0) target = $region21
    $region20: #{tpu_custom_call.1} parent=1 // pred_region
      _
    $region21: #{tpu_custom_call.1} parent=1 // pred_fallthru
      _
    // Predicated region
    $region22: #{tpu_custom_call.1} parent=1 // pred_check
      _
    $region23: #{tpu_custom_call.1} parent=1 // pred_check_branch
      %36 = sbr.rel (0) target = $region25
    $region24: #{tpu_custom_call.1} parent=1 // pred_region
      %38 = vsyncadd [#allocation6], 0
      %s39 = sshll.u32 %s5, 4
      %s40 = int_to_ptr.hbm [resolvable:$true] %s39
      %s41 = sshll.u32 [#allocation5], 4
      %s42 = int_to_ptr.vmem [resolvable:$true] %s41
      %47 = dma.hbm_to_vmem [thread:$0]  %s40, 1024, %s42, [#allocation6], 64, 64, 4
    $region25: #{tpu_custom_call.1} parent=1 // pred_fallthru
      _
    // Predicated region
    $region26: #{tpu_custom_call.1} parent=1 // pred_check
      _
    $region27: #{tpu_custom_call.1} parent=1 // pred_check_branch
      %49 = sbr.rel (0) target = $region29
    $region28: #{tpu_custom_call.1} parent=1 // pred_region
      %51 = dma.done [#allocation3], 2048
    $region29: #{tpu_custom_call.1} parent=1 // pred_fallthru
      _
    // Predicated region
    $region30: #{tpu_custom_call.1} parent=1 // pred_check
      _
    $region31: #{tpu_custom_call.1} parent=1 // pred_check_branch
      %53 = sbr.rel (0) target = $region33
    $region32: #{tpu_custom_call.1} parent=1 // pred_region
      %55 = dma.done [#allocation6], 1024
    $region33: #{tpu_custom_call.1} parent=1 // pred_fallthru
      _
    %v56 = vld [vmem:[#allocation2] sm:$0xff]
    %v57 = vld [vmem:[#allocation2 + $0x8] sm:$0xff]
    %v58 = vld [vmem:[#allocation2 + $0x10] sm:$0xff]
    %v59 = vld [vmem:[#allocation2 + $0x18] sm:$0xff]
    %v60 = vld [vmem:[#allocation2 + $0x20] sm:$0xff]
    %v61 = vld [vmem:[#allocation2 + $0x28] sm:$0xff]
    %v62 = vld [vmem:[#allocation2 + $0x30] sm:$0xff]
    %v63 = vld [vmem:[#allocation2 + $0x38] sm:$0xff]
    %v64 = vld [vmem:[#allocation2 + $0x40] sm:$0xff]
    %v65 = vld [vmem:[#allocation2 + $0x48] sm:$0xff]
    %v66 = vld [vmem:[#allocation2 + $0x50] sm:$0xff]
    %v67 = vld [vmem:[#allocation2 + $0x58] sm:$0xff]
    %v68 = vld [vmem:[#allocation2 + $0x60] sm:$0xff]
    %v69 = vld [vmem:[#allocation2 + $0x68] sm:$0xff]
    %v70 = vld [vmem:[#allocation2 + $0x70] sm:$0xff]
    %v71 = vld [vmem:[#allocation2 + $0x78] sm:$0xff]
    %v72 = vld [vmem:[%s0] sm:$0xff]
    %v73 = vld [vmem:[%s0 + $0x8] sm:$0xff]
    %v74 = vld [vmem:[%s0 + $0x10] sm:$0xff]
    %v75 = vld [vmem:[%s0 + $0x18] sm:$0xff]
    %v76 = vld [vmem:[%s0 + $0x20] sm:$0xff]
    %v77 = vld [vmem:[%s0 + $0x28] sm:$0xff]
    %v78 = vld [vmem:[%s0 + $0x30] sm:$0xff]
    %v79 = vld [vmem:[%s0 + $0x38] sm:$0xff]
    %v80 = vld [vmem:[%s0 + $0x40] sm:$0xff]
    %v81 = vld [vmem:[%s0 + $0x48] sm:$0xff]
    %v82 = vld [vmem:[%s0 + $0x50] sm:$0xff]
    %v83 = vld [vmem:[%s0 + $0x58] sm:$0xff]
    %v84 = vld [vmem:[%s0 + $0x60] sm:$0xff]
    %v85 = vld [vmem:[%s0 + $0x68] sm:$0xff]
    %v86 = vld [vmem:[%s0 + $0x70] sm:$0xff]
    %v87 = vld [vmem:[%s0 + $0x78] sm:$0xff]
    %v88 = vld [vmem:[%s2] sm:$0xff]
    %v89 = vld [vmem:[%s2 + $0x8] sm:$0xff]
    %v90 = vld [vmem:[%s2 + $0x10] sm:$0xff]
    %v91 = vld [vmem:[%s2 + $0x18] sm:$0xff]
    %v92 = vld [vmem:[%s2 + $0x20] sm:$0xff]
    %v93 = vld [vmem:[%s2 + $0x28] sm:$0xff]
    %v94 = vld [vmem:[%s2 + $0x30] sm:$0xff]
    %v95 = vld [vmem:[%s2 + $0x38] sm:$0xff]
    %v96 = vld [vmem:[%s2 + $0x40] sm:$0xff]
    %v97 = vld [vmem:[%s2 + $0x48] sm:$0xff]
    %v98 = vld [vmem:[%s2 + $0x50] sm:$0xff]
    %v99 = vld [vmem:[%s2 + $0x58] sm:$0xff]
    %v100 = vld [vmem:[%s2 + $0x60] sm:$0xff]
    %v101 = vld [vmem:[%s2 + $0x68] sm:$0xff]
    %v102 = vld [vmem:[%s2 + $0x70] sm:$0xff]
    %v103 = vld [vmem:[%s2 + $0x78] sm:$0xff]
    %105 = vset.pattern.permute.xlu0 0
    %106 = vperm.xlu0 %105, %v88
    %v107 = vpop.permute.xlu0 %106
    %110 = vset.pattern.permute.xlu0 0
    %111 = vperm.xlu0 %110, %v89
    %v112 = vpop.permute.xlu0 %111
    %115 = vset.pattern.permute.xlu0 0
    %116 = vperm.xlu0 %115, %v90
    %v117 = vpop.permute.xlu0 %116
    %120 = vset.pattern.permute.xlu0 0
    %121 = vperm.xlu0 %120, %v91
    %v122 = vpop.permute.xlu0 %121
    %125 = vset.pattern.permute.xlu0 0
    %126 = vperm.xlu0 %125, %v92
    %v127 = vpop.permute.xlu0 %126
    %130 = vset.pattern.permute.xlu0 0
    %131 = vperm.xlu0 %130, %v93
    %v132 = vpop.permute.xlu0 %131
    %135 = vset.pattern.permute.xlu0 0
    %136 = vperm.xlu0 %135, %v94
    %v137 = vpop.permute.xlu0 %136
    %140 = vset.pattern.permute.xlu0 0
    %141 = vperm.xlu0 %140, %v95
    %v142 = vpop.permute.xlu0 %141
    %145 = vset.pattern.permute.xlu0 0
    %146 = vperm.xlu0 %145, %v96
    %v147 = vpop.permute.xlu0 %146
    %150 = vset.pattern.permute.xlu0 0
    %151 = vperm.xlu0 %150, %v97
    %v152 = vpop.permute.xlu0 %151
    %155 = vset.pattern.permute.xlu0 0
    %156 = vperm.xlu0 %155, %v98
    %v157 = vpop.permute.xlu0 %156
    %160 = vset.pattern.permute.xlu0 0
    %161 = vperm.xlu0 %160, %v99
    %v162 = vpop.permute.xlu0 %161
    %165 = vset.pattern.permute.xlu0 0
    %166 = vperm.xlu0 %165, %v100
    %v167 = vpop.permute.xlu0 %166
    %170 = vset.pattern.permute.xlu0 0
    %171 = vperm.xlu0 %170, %v101
    %v172 = vpop.permute.xlu0 %171
    %175 = vset.pattern.permute.xlu0 0
    %176 = vperm.xlu0 %175, %v102
    %v177 = vpop.permute.xlu0 %176
    %180 = vset.pattern.permute.xlu0 0
    %181 = vperm.xlu0 %180, %v103
    %v182 = vpop.permute.xlu0 %181
    %184 = vmatpush.msra.mxu0 %v87
    %185 = vmatpush.msra.mxu0 %v86
    %186 = vmatpush.msra.mxu0 %v85
    %187 = vmatpush.msra.mxu0 %v84
    %188 = vmatpush.msra.mxu0 %v83
    %189 = vmatpush.msra.mxu0 %v82
    %190 = vmatpush.msra.mxu0 %v81
    %191 = vmatpush.msra.mxu0 %v80
    %192 = vmatpush.msra.mxu0 %v79
    %193 = vmatpush.msra.mxu0 %v78
    %194 = vmatpush.msra.mxu0 %v77
    %195 = vmatpush.msra.mxu0 %v76
    %196 = vmatpush.msra.mxu0 %v75
    %197 = vmatpush.msra.mxu0 %v74
    %198 = vmatpush.msra.mxu0 %v73
    %199 = vmatpush.msra.mxu0 %v72
    %200 = vmatmul.f32.gmra.mxu0 %v56
    %v201 = vpop.f32.mrf.mxu0
    %v202 = vadd.f32 %v107, %v201
    %203 = vmatmul.f32.gmra.mxu0 %v57
    %v204 = vpop.f32.mrf.mxu0
    %v205 = vadd.f32 %v112, %v204
    %206 = vmatmul.f32.gmra.mxu0 %v58
    %v207 = vpop.f32.mrf.mxu0
    %v208 = vadd.f32 %v117, %v207
    %209 = vmatmul.f32.gmra.mxu0 %v59
    %v210 = vpop.f32.mrf.mxu0
    %v211 = vadd.f32 %v122, %v210
    %212 = vmatmul.f32.gmra.mxu0 %v60
    %v213 = vpop.f32.mrf.mxu0
    %v214 = vadd.f32 %v127, %v213
    %215 = vmatmul.f32.gmra.mxu0 %v61
    %v216 = vpop.f32.mrf.mxu0
    %v217 = vadd.f32 %v132, %v216
    %218 = vmatmul.f32.gmra.mxu0 %v62
    %v219 = vpop.f32.mrf.mxu0
    %v220 = vadd.f32 %v137, %v219
    %221 = vmatmul.f32.gmra.mxu0 %v63
    %v222 = vpop.f32.mrf.mxu0
    %v223 = vadd.f32 %v142, %v222
    %224 = vmatmul.f32.gmra.mxu0 %v64
    %v225 = vpop.f32.mrf.mxu0
    %v226 = vadd.f32 %v147, %v225
    %227 = vmatmul.f32.gmra.mxu0 %v65
    %v228 = vpop.f32.mrf.mxu0
    %v229 = vadd.f32 %v152, %v228
    %230 = vmatmul.f32.gmra.mxu0 %v66
    %v231 = vpop.f32.mrf.mxu0
    %v232 = vadd.f32 %v157, %v231
    %233 = vmatmul.f32.gmra.mxu0 %v67
    %v234 = vpop.f32.mrf.mxu0
    %v235 = vadd.f32 %v162, %v234
    %236 = vmatmul.f32.gmra.mxu0 %v68
    %v237 = vpop.f32.mrf.mxu0
    %v238 = vadd.f32 %v167, %v237
    %239 = vmatmul.f32.gmra.mxu0 %v69
    %v240 = vpop.f32.mrf.mxu0
    %v241 = vadd.f32 %v172, %v240
    %242 = vmatmul.f32.gmra.mxu0 %v70
    %v243 = vpop.f32.mrf.mxu0
    %v244 = vadd.f32 %v177, %v243
    %245 = vmatmul.f32.gmra.mxu0 %v71
    %v246 = vpop.f32.mrf.mxu0
    %v247 = vadd.f32 %v182, %v246
    %248 = vdwg.mxu0
    %v249 = vmax.f32 %v202, 0.0
    %v250 = vmax.f32 %v205, 0.0
    %v251 = vmax.f32 %v208, 0.0
    %v252 = vmax.f32 %v211, 0.0
    %v253 = vmax.f32 %v214, 0.0
    %v254 = vmax.f32 %v217, 0.0
    %v255 = vmax.f32 %v220, 0.0
    %v256 = vmax.f32 %v223, 0.0
    %v257 = vmax.f32 %v226, 0.0
    %v258 = vmax.f32 %v229, 0.0
    %v259 = vmax.f32 %v232, 0.0
    %v260 = vmax.f32 %v235, 0.0
    %v261 = vmax.f32 %v238, 0.0
    %v262 = vmax.f32 %v241, 0.0
    %v263 = vmax.f32 %v244, 0.0
    %v264 = vmax.f32 %v247, 0.0
    %v265 = vld [vmem:[%s3] sm:$0xff]
    %v266 = vld [vmem:[%s3 + $0x8] sm:$0xff]
    %v267 = vld [vmem:[%s4] sm:$0xff]
    %v268 = vld [vmem:[%s4 + $0x8] sm:$0xff]
    %270 = vset.pattern.permute.xlu0 0
    %271 = vperm.xlu0 %270, %v267
    %v272 = vpop.permute.xlu0 %271
    %275 = vset.pattern.permute.xlu0 0
    %276 = vperm.xlu0 %275, %v268
    %v277 = vpop.permute.xlu0 %276
    %279 = vmatpush.msra.mxu0 %v264
    %280 = vmatpush.msra.mxu0 %v263
    %281 = vmatpush.msra.mxu0 %v262
    %282 = vmatpush.msra.mxu0 %v261
    %283 = vmatpush.msra.mxu0 %v260
    %284 = vmatpush.msra.mxu0 %v259
    %285 = vmatpush.msra.mxu0 %v258
    %286 = vmatpush.msra.mxu0 %v257
    %287 = vmatpush.msra.mxu0 %v256
    %288 = vmatpush.msra.mxu0 %v255
    %289 = vmatpush.msra.mxu0 %v254
    %290 = vmatpush.msra.mxu0 %v253
    %291 = vmatpush.msra.mxu0 %v252
    %292 = vmatpush.msra.mxu0 %v251
    %293 = vmatpush.msra.mxu0 %v250
    %294 = vmatpush.msra.mxu0 %v249
    %295 = vmatmul.f32.gmra.mxu0 %v265
    %v296 = vpop.f32.mrf.mxu0
    %v297 = vadd.f32 %v272, %v296
    %298 = vmatmul.f32.gmra.mxu0 %v266
    %v299 = vpop.f32.mrf.mxu0
    %v300 = vadd.f32 %v277, %v299
    %301 = vdwg.mxu0
    %v302 = vmul.f32 %v297, 0.1
    %v303 = vmul.f32 %v300, 0.1
    %v304 = vpack.c.bf16 %v300, %v297
    %v305 = vld [vmem:[#allocation5] sm:$0xf]
    %v306 = vld [vmem:[#allocation5 + $0x4] sm:$0xf]
    %v307 = vld [vmem:[#allocation5 + $0x8] sm:$0xf]
    %v308 = vld [vmem:[#allocation5 + $0xc] sm:$0xf]
    %v309 = vld [vmem:[#allocation5 + $0x10] sm:$0xf]
    %v310 = vld [vmem:[#allocation5 + $0x14] sm:$0xf]
    %v311 = vld [vmem:[#allocation5 + $0x18] sm:$0xf]
    %v312 = vld [vmem:[#allocation5 + $0x1c] sm:$0xf]
    %v313 = vld [vmem:[#allocation5 + $0x20] sm:$0xf]
    %v314 = vld [vmem:[#allocation5 + $0x24] sm:$0xf]
    %v315 = vld [vmem:[#allocation5 + $0x28] sm:$0xf]
    %v316 = vld [vmem:[#allocation5 + $0x2c] sm:$0xf]
    %v317 = vld [vmem:[#allocation5 + $0x30] sm:$0xf]
    %v318 = vld [vmem:[#allocation5 + $0x34] sm:$0xf]
    %v319 = vld [vmem:[#allocation5 + $0x38] sm:$0xf]
    %v320 = vld [vmem:[#allocation5 + $0x3c] sm:$0xf]
    %v337 = vunpack.c.l.b16 %v305
    %v338 = vunpack.c.l.b16 %v306
    %v339 = vunpack.c.l.b16 %v307
    %v340 = vunpack.c.l.b16 %v308
    %v341 = vunpack.c.l.b16 %v309
    %v342 = vunpack.c.l.b16 %v310
    %v343 = vunpack.c.l.b16 %v311
    %v344 = vunpack.c.l.b16 %v312
    %v345 = vunpack.c.l.b16 %v313
    %v346 = vunpack.c.l.b16 %v314
    %v347 = vunpack.c.l.b16 %v315
    %v348 = vunpack.c.l.b16 %v316
    %v349 = vunpack.c.l.b16 %v317
    %v350 = vunpack.c.l.b16 %v318
    %v351 = vunpack.c.l.b16 %v319
    %v352 = vunpack.c.l.b16 %v320
    %v353 = vpack.c.b16 %v338, %v337
    %v354 = vpack.c.b16 %v340, %v339
    %v355 = vpack.c.b16 %v342, %v341
    %v356 = vpack.c.b16 %v344, %v343
    %v357 = vpack.c.b16 %v346, %v345
    %v358 = vpack.c.b16 %v348, %v347
    %v359 = vpack.c.b16 %v350, %v349
    %v360 = vpack.c.b16 %v352, %v351
    %369 = vmatpush.bf16.msra.mxu0 %v360
    %370 = vmatpush.bf16.msra.mxu0 %v359
    %371 = vmatpush.bf16.msra.mxu0 %v358
    %372 = vmatpush.bf16.msra.mxu0 %v357
    %373 = vmatpush.bf16.msra.mxu0 %v356
    %374 = vmatpush.bf16.msra.mxu0 %v355
    %375 = vmatpush.bf16.msra.mxu0 %v354
    %376 = vmatpush.bf16.msra.mxu0 %v353
    %377 = vmatmul.bf16.gmra.mxu0 %v304
    %v378 = vpop.f32.mrf.mxu0
    %v379 = vadd.f32 %v302, %v378
    %v380 = vpop.f32.mrf.mxu0
    %v381 = vadd.f32 %v303, %v380
    %382 = vdwg.mxu0
    %v383 = vpack.c.bf16 %v381, %v379
    %384 = vmatpush.bf16.msra.mxu0 %v360
    %385 = vmatpush.bf16.msra.mxu0 %v359
    %386 = vmatpush.bf16.msra.mxu0 %v358
    %387 = vmatpush.bf16.msra.mxu0 %v357
    %388 = vmatpush.bf16.msra.mxu0 %v356
    %389 = vmatpush.bf16.msra.mxu0 %v355
    %390 = vmatpush.bf16.msra.mxu0 %v354
    %391 = vmatpush.bf16.msra.mxu0 %v353
    %392 = vmatmul.bf16.gmra.mxu0 %v383
    %v393 = vpop.f32.mrf.mxu0
    %v394 = vadd.f32 %v302, %v393
    %v395 = vpop.f32.mrf.mxu0
    %v396 = vadd.f32 %v303, %v395
    %397 = vdwg.mxu0
    %v398 = vpack.c.bf16 %v396, %v394
    %399 = vmatpush.bf16.msra.mxu0 %v360
    %400 = vmatpush.bf16.msra.mxu0 %v359
    %401 = vmatpush.bf16.msra.mxu0 %v358
    %402 = vmatpush.bf16.msra.mxu0 %v357
    %403 = vmatpush.bf16.msra.mxu0 %v356
    %404 = vmatpush.bf16.msra.mxu0 %v355
    %405 = vmatpush.bf16.msra.mxu0 %v354
    %406 = vmatpush.bf16.msra.mxu0 %v353
    %407 = vmatmul.bf16.gmra.mxu0 %v398
    %v408 = vpop.f32.mrf.mxu0
    %v409 = vadd.f32 %v302, %v408
    %v410 = vpop.f32.mrf.mxu0
    %v411 = vadd.f32 %v303, %v410
    %412 = vdwg.mxu0
    %v413 = vpack.c.bf16 %v411, %v409
    %414 = vmatpush.bf16.msra.mxu0 %v360
    %415 = vmatpush.bf16.msra.mxu0 %v359
    %416 = vmatpush.bf16.msra.mxu0 %v358
    %417 = vmatpush.bf16.msra.mxu0 %v357
    %418 = vmatpush.bf16.msra.mxu0 %v356
    %419 = vmatpush.bf16.msra.mxu0 %v355
    %420 = vmatpush.bf16.msra.mxu0 %v354
    %421 = vmatpush.bf16.msra.mxu0 %v353
    %422 = vmatmul.bf16.gmra.mxu0 %v413
    %v423 = vpop.f32.mrf.mxu0
    %v424 = vadd.f32 %v302, %v423
    %v425 = vpop.f32.mrf.mxu0
    %v426 = vadd.f32 %v303, %v425
    %427 = vdwg.mxu0
    %v428 = vpack.c.bf16 %v426, %v424
    %429 = vmatpush.bf16.msra.mxu0 %v360
    %430 = vmatpush.bf16.msra.mxu0 %v359
    %431 = vmatpush.bf16.msra.mxu0 %v358
    %432 = vmatpush.bf16.msra.mxu0 %v357
    %433 = vmatpush.bf16.msra.mxu0 %v356
    %434 = vmatpush.bf16.msra.mxu0 %v355
    %435 = vmatpush.bf16.msra.mxu0 %v354
    %436 = vmatpush.bf16.msra.mxu0 %v353
    %437 = vmatmul.bf16.gmra.mxu0 %v428
    %v438 = vpop.f32.mrf.mxu0
    %v439 = vadd.f32 %v302, %v438
    %v440 = vpop.f32.mrf.mxu0
    %v441 = vadd.f32 %v303, %v440
    %442 = vdwg.mxu0
    %v443 = vpack.c.bf16 %v441, %v439
    %444 = vmatpush.bf16.msra.mxu0 %v360
    %445 = vmatpush.bf16.msra.mxu0 %v359
    %446 = vmatpush.bf16.msra.mxu0 %v358
    %447 = vmatpush.bf16.msra.mxu0 %v357
    %448 = vmatpush.bf16.msra.mxu0 %v356
    %449 = vmatpush.bf16.msra.mxu0 %v355
    %450 = vmatpush.bf16.msra.mxu0 %v354
    %451 = vmatpush.bf16.msra.mxu0 %v353
    %452 = vmatmul.bf16.gmra.mxu0 %v443
    %v453 = vpop.f32.mrf.mxu0
    %v454 = vadd.f32 %v302, %v453
    %v455 = vpop.f32.mrf.mxu0
    %v456 = vadd.f32 %v303, %v455
    %457 = vdwg.mxu0
    %v458 = vpack.c.bf16 %v456, %v454
    %459 = vmatpush.bf16.msra.mxu0 %v360
    %460 = vmatpush.bf16.msra.mxu0 %v359
    %461 = vmatpush.bf16.msra.mxu0 %v358
    %462 = vmatpush.bf16.msra.mxu0 %v357
    %463 = vmatpush.bf16.msra.mxu0 %v356
    %464 = vmatpush.bf16.msra.mxu0 %v355
    %465 = vmatpush.bf16.msra.mxu0 %v354
    %466 = vmatpush.bf16.msra.mxu0 %v353
    %467 = vmatmul.bf16.gmra.mxu0 %v458
    %v468 = vpop.f32.mrf.mxu0
    %v469 = vadd.f32 %v302, %v468
    %v470 = vpop.f32.mrf.mxu0
    %v471 = vadd.f32 %v303, %v470
    %472 = vdwg.mxu0
    %v473 = vpack.c.bf16 %v471, %v469
    %474 = vmatpush.bf16.msra.mxu0 %v360
    %475 = vmatpush.bf16.msra.mxu0 %v359
    %476 = vmatpush.bf16.msra.mxu0 %v358
    %477 = vmatpush.bf16.msra.mxu0 %v357
    %478 = vmatpush.bf16.msra.mxu0 %v356
    %479 = vmatpush.bf16.msra.mxu0 %v355
    %480 = vmatpush.bf16.msra.mxu0 %v354
    %481 = vmatpush.bf16.msra.mxu0 %v353
    %482 = vmatmul.bf16.gmra.mxu0 %v473
    %v483 = vpop.f32.mrf.mxu0
    %v484 = vadd.f32 %v302, %v483
    %v485 = vpop.f32.mrf.mxu0
    %v486 = vadd.f32 %v303, %v485
    %487 = vdwg.mxu0
    %v488 = vpack.c.bf16 %v486, %v484
    %489 = vmatpush.bf16.msra.mxu0 %v360
    %490 = vmatpush.bf16.msra.mxu0 %v359
    %491 = vmatpush.bf16.msra.mxu0 %v358
    %492 = vmatpush.bf16.msra.mxu0 %v357
    %493 = vmatpush.bf16.msra.mxu0 %v356
    %494 = vmatpush.bf16.msra.mxu0 %v355
    %495 = vmatpush.bf16.msra.mxu0 %v354
    %496 = vmatpush.bf16.msra.mxu0 %v353
    %497 = vmatmul.bf16.gmra.mxu0 %v488
    %v498 = vpop.f32.mrf.mxu0
    %v499 = vadd.f32 %v302, %v498
    %v500 = vpop.f32.mrf.mxu0
    %v501 = vadd.f32 %v303, %v500
    %502 = vdwg.mxu0
    %v503 = vpack.c.bf16 %v501, %v499
    %504 = vmatpush.bf16.msra.mxu0 %v360
    %505 = vmatpush.bf16.msra.mxu0 %v359
    %506 = vmatpush.bf16.msra.mxu0 %v358
    %507 = vmatpush.bf16.msra.mxu0 %v357
    %508 = vmatpush.bf16.msra.mxu0 %v356
    %509 = vmatpush.bf16.msra.mxu0 %v355
    %510 = vmatpush.bf16.msra.mxu0 %v354
    %511 = vmatpush.bf16.msra.mxu0 %v353
    %512 = vmatmul.bf16.gmra.mxu0 %v503
    %v513 = vpop.f32.mrf.mxu0
    %v514 = vadd.f32 %v302, %v513
    %v515 = vpop.f32.mrf.mxu0
    %v516 = vadd.f32 %v303, %v515
    %517 = vdwg.mxu0
    %518 = vst [vmem:[#allocation7] sm:$0xff] %v514
    %519 = vst [vmem:[#allocation7 + $0x8] sm:$0xff] %v516
    // Predicated region
    $region34: #{tpu_custom_call.1} parent=1 // pred_check
      _
    $region35: #{tpu_custom_call.1} parent=1 // pred_check_branch
      %521 = sbr.rel (0) target = $region37
    $region36: #{tpu_custom_call.1} parent=1 // pred_region
      %523 = vsyncadd [#allocation4], 0
      %s524 = sshll.u32 [#allocation7], 4
      %s525 = int_to_ptr.vmem [resolvable:$true] %s524
      %s526 = sshll.u32 %s6, 4
      %s527 = int_to_ptr.hbm [resolvable:$true] %s526
      %532 = dma.vmem_to_hbm [thread:$0]  %s525, 256, %s527, [#allocation4], 128, 128, 8
    $region37: #{tpu_custom_call.1} parent=1 // pred_fallthru
      _
    // Predicated region
    $region38: #{tpu_custom_call.1} parent=1 // pred_check
      _
    $region39: #{tpu_custom_call.1} parent=1 // pred_check_branch
      %534 = sbr.rel (0) target = $region41
    $region40: #{tpu_custom_call.1} parent=1 // pred_region
      %536 = dma.done [#allocation4], 256
    $region41: #{tpu_custom_call.1} parent=1 // pred_fallthru
      _
    %537 = vsyncpa [#allocation3], 1
    %538 = vsyncpa [#allocation6], 1
    %539 = vsyncpa [#allocation4], 1

</llo_original>
